<compile_context>
chip_gen: v7x
topology: tpu7x:2x2x1
jax: 0.10.0
libtpu: 0.0.40
codegen_flags: <defaults>
</compile_context>

<pallas_src>
import functools

import jax
import jax.numpy as jnp
from jax import lax
from jax.experimental import pallas as pl
from jax.experimental.pallas import tpu as pltpu


def _self_attention_kernel(x_ref, w_ref, o_ref, *, heads, emb_size):
    # x_ref : (1, T, D)        — one batch element
    # w_ref : (D, 3*H*E)       — fused [Wq | Wk | Wv] projection (loop-invariant)
    # o_ref : (1, T, H*E)      — lane-dense output (H*E = 128 lanes)
    H, E = heads, emb_size
    HE = H * E

    x = x_ref[0]                       # (T, D)
    w = w_ref[...]                     # (D, 3*H*E)

    # One MXU pass for Q, K, V of all heads.
    qkv = jnp.dot(x, w, preferred_element_type=jnp.float32)   # (T, 3*H*E)

    scale = 1.0 / (E ** 0.5)           # == (E**-0.25 on q) * (E**-0.25 on k)

    outs = []
    for h in range(H):                 # H is small & static -> unrolled at trace time
        q = qkv[:, h * E:(h + 1) * E]                  # (T, E)
        k = qkv[:, HE + h * E:HE + (h + 1) * E]        # (T, E)
        v = qkv[:, 2 * HE + h * E:2 * HE + (h + 1) * E]

        # scores = q @ k^T without materializing a transpose of k.
        s = lax.dot_general(q, k, (((1,), (1,)), ((), ())),
                            preferred_element_type=jnp.float32)   # (T, T)
        s = s * scale
        s = s - jnp.max(s, axis=-1, keepdims=True)
        p = jnp.exp(s)
        p = p * pl.reciprocal(jnp.sum(p, axis=-1, keepdims=True), approx=True)

        outs.append(jnp.dot(p, v, preferred_element_type=jnp.float32))  # (T, E)

    # Concatenate heads along lanes -> single full (T, H*E) unmasked store.
    o_ref[0] = jnp.concatenate(outs, axis=-1).astype(o_ref.dtype)


def self_attention_pallas(x, w_packed, heads, emb_size):
    """x: (B, T, D). w_packed: (D, 3*H*E) = [Wq^T | Wk^T | Wv^T] concatenated."""
    B, T, D = x.shape
    H, E = heads, emb_size
    HE = H * E
    kernel = functools.partial(_self_attention_kernel, heads=H, emb_size=E)

    return pl.pallas_call(
        kernel,
        out_shape=jax.ShapeDtypeStruct((B, T, HE), x.dtype),
        grid_spec=pltpu.PrefetchScalarGridSpec(
            num_scalar_prefetch=0,
            grid=(B,),
            in_specs=[
                pl.BlockSpec((1, T, D), lambda b: (b, 0, 0)),
                pl.BlockSpec((D, 3 * HE), lambda b: (0, 0)),   # loop-invariant weight
            ],
            out_specs=pl.BlockSpec((1, T, HE), lambda b: (b, 0, 0)),
        ),
        compiler_params=pltpu.CompilerParams(
            dimension_semantics=("parallel",)),
    )(x, w_packed)


def _reference(x, wq_t, wk_t, wv_t, heads, emb_size):
    # Pure-JAX reference mirroring the PyTorch module math exactly.
    B, T, D = x.shape
    H, E = heads, emb_size
    inv4 = 1.0 / (E ** 0.25)
    q = (x @ wq_t).reshape(B, T, H, E).transpose(0, 2, 1, 3) * inv4
    k = (x @ wk_t).reshape(B, T, H, E).transpose(0, 2, 1, 3) * inv4
    v = (x @ wv_t).reshape(B, T, H, E).transpose(0, 2, 1, 3)
    dot = jnp.einsum('bhqe,bhke->bhqk', q, k)
    p = jax.nn.softmax(dot, axis=-1)
    out = jnp.einsum('bhqk,bhke->bhqe', p, v)
    return out.transpose(0, 2, 1, 3).reshape(B, T, H * E)


if __name__ == "__main__":
    # Module hyperparameters (small, consistent with the module defaults)
    B, T = 2, 8
    INPUT_SIZE = 32        # input_size
    HEADS = 4              # heads
    EMB = 32               # embed_size

    key = jax.random.PRNGKey(0)
    kx, kq, kk, kv = jax.random.split(key, 4)

    x = jax.random.normal(kx, (B, T, INPUT_SIZE), dtype=jnp.float32)

    # nn.Linear(input_size, emb*heads, bias=False): y = x @ W.T with W of shape
    # (H*E, D).  Build W.T of shape (D, H*E) directly; the .view(b,t,H,E) head
    # split means head h owns columns [h*E, (h+1)*E) of W.T.
    def make_wt(k):
        return jax.random.normal(k, (INPUT_SIZE, HEADS * EMB), dtype=jnp.float32) * 0.05

    wq_t = make_wt(kq)
    wk_t = make_wt(kk)
    wv_t = make_wt(kv)

    # Fused projection weight: (D, 3*H*E) = [Wq^T | Wk^T | Wv^T]
    w_packed = jnp.concatenate([wq_t, wk_t, wv_t], axis=1)

    out = self_attention_pallas(x, w_packed, HEADS, EMB)
    out = jax.block_until_ready(out)

    ref = _reference(x, wq_t, wk_t, wv_t, HEADS, EMB)
    assert out.shape == (B, T, HEADS * EMB), out.shape
    # approx reciprocal in the softmax denominator -> slightly relaxed tolerance
    assert jnp.allclose(out, ref, atol=1e-3, rtol=1e-3), "mismatch vs reference"

    # TODO(synk): module also caches self.dot / self.values as side attributes;
    # only the returned tensor is produced here.
    print("KERNEL_OK")
</pallas_src>

<mosaic_0001>
module attributes {stable_mosaic.version = 11 : i64} {
  func.func @_self_attention_kernel(%arg0: i32, %arg1: memref<1x8x32xf32, #tpu.memory_space<vmem>>, %arg2: memref<32x384xf32, #tpu.memory_space<vmem>>, %arg3: memref<1x8x128xf32, #tpu.memory_space<vmem>>) attributes {dimension_semantics = [#tpu.dimension_semantics<parallel>], iteration_bounds = array<i64: 2>, scalar_prefetch = 0 : i64, scratch_operands = 0 : i64, tpu.core_type = #tpu.core_type<tc>, window_params = [{transform_indices = @transform_0, window_bounds = array<i64: 1, 8, 32>}, {pipeline_mode = #tpu.pipeline_mode<synchronous>, transform_indices = @transform_1, window_bounds = array<i64: 32, 384>}, {transform_indices = @transform_2, window_bounds = array<i64: 1, 8, 128>}]} {
    %c0 = arith.constant 0 : index
    %c0_0 = arith.constant 0 : index
    %c0_1 = arith.constant 0 : index
    %0 = vector.load %arg1[%c0, %c0_0, %c0_1] : memref<1x8x32xf32, #tpu.memory_space<vmem>>, vector<1x8x32xf32>
    %1 = vector.shape_cast %0 : vector<1x8x32xf32> to vector<8x32xf32>
    %c0_2 = arith.constant 0 : index
    %c0_3 = arith.constant 0 : index
    %2 = vector.load %arg2[%c0_2, %c0_3] : memref<32x384xf32, #tpu.memory_space<vmem>>, vector<32x384xf32>
    %cst = arith.constant dense<0.000000e+00> : vector<8x384xf32>
    %3 = tpu.matmul %1, %2, %cst {dimension_numbers = #tpu.dot_dimension_numbers<[1], [0], [0], [1], [0, 0, 1, 1], [], []>} : vector<8x32xf32>, vector<32x384xf32>, vector<8x384xf32> -> vector<8x384xf32>
    %4 = vector.extract_strided_slice %3 {offsets = [0, 0], sizes = [8, 32], strides = [1, 1]} : vector<8x384xf32> to vector<8x32xf32>
    %5 = vector.extract_strided_slice %3 {offsets = [0, 128], sizes = [8, 32], strides = [1, 1]} : vector<8x384xf32> to vector<8x32xf32>
    %6 = vector.extract_strided_slice %3 {offsets = [0, 256], sizes = [8, 32], strides = [1, 1]} : vector<8x384xf32> to vector<8x32xf32>
    %cst_4 = arith.constant dense<0.000000e+00> : vector<8x8xf32>
    %7 = tpu.matmul %4, %5, %cst_4 {dimension_numbers = #tpu.dot_dimension_numbers<[1], [1], [0], [0], [0, 0, 1, 0], [], []>} : vector<8x32xf32>, vector<8x32xf32>, vector<8x8xf32> -> vector<8x8xf32>
    %cst_5 = arith.constant 0.176776692 : f32
    %8 = vector.broadcast %cst_5 : f32 to vector<8x8xf32>
    %9 = arith.mulf %7, %8 : vector<8x8xf32>
    %cst_6 = arith.constant dense<0xFF800000> : vector<8xf32>
    %10 = vector.multi_reduction <maximumf>, %9, %cst_6 [1] : vector<8x8xf32> to vector<8xf32>
    %11 = vector.shape_cast %10 : vector<8xf32> to vector<8x1xf32>
    %12 = vector.broadcast %11 : vector<8x1xf32> to vector<8x8xf32>
    %13 = arith.subf %9, %12 : vector<8x8xf32>
    %14 = math.exp %13 : vector<8x8xf32>
    %cst_7 = arith.constant dense<0.000000e+00> : vector<8xf32>
    %15 = vector.multi_reduction <add>, %14, %cst_7 [1] : vector<8x8xf32> to vector<8xf32>
    %16 = vector.shape_cast %15 : vector<8xf32> to vector<8x1xf32>
    %17 = tpu.reciprocal %16 {approx = true} : vector<8x1xf32> -> vector<8x1xf32>
    %18 = vector.broadcast %17 : vector<8x1xf32> to vector<8x8xf32>
    %19 = arith.mulf %14, %18 : vector<8x8xf32>
    %cst_8 = arith.constant dense<0.000000e+00> : vector<8x32xf32>
    %20 = tpu.matmul %19, %6, %cst_8 {dimension_numbers = #tpu.dot_dimension_numbers<[1], [0], [0], [1], [0, 0, 1, 1], [], []>} : vector<8x8xf32>, vector<8x32xf32>, vector<8x32xf32> -> vector<8x32xf32>
    %21 = vector.extract_strided_slice %3 {offsets = [0, 32], sizes = [8, 32], strides = [1, 1]} : vector<8x384xf32> to vector<8x32xf32>
    %22 = vector.extract_strided_slice %3 {offsets = [0, 160], sizes = [8, 32], strides = [1, 1]} : vector<8x384xf32> to vector<8x32xf32>
    %23 = vector.extract_strided_slice %3 {offsets = [0, 288], sizes = [8, 32], strides = [1, 1]} : vector<8x384xf32> to vector<8x32xf32>
    %cst_9 = arith.constant dense<0.000000e+00> : vector<8x8xf32>
    %24 = tpu.matmul %21, %22, %cst_9 {dimension_numbers = #tpu.dot_dimension_numbers<[1], [1], [0], [0], [0, 0, 1, 0], [], []>} : vector<8x32xf32>, vector<8x32xf32>, vector<8x8xf32> -> vector<8x8xf32>
    %cst_10 = arith.constant 0.176776692 : f32
    %25 = vector.broadcast %cst_10 : f32 to vector<8x8xf32>
    %26 = arith.mulf %24, %25 : vector<8x8xf32>
    %cst_11 = arith.constant dense<0xFF800000> : vector<8xf32>
    %27 = vector.multi_reduction <maximumf>, %26, %cst_11 [1] : vector<8x8xf32> to vector<8xf32>
    %28 = vector.shape_cast %27 : vector<8xf32> to vector<8x1xf32>
    %29 = vector.broadcast %28 : vector<8x1xf32> to vector<8x8xf32>
    %30 = arith.subf %26, %29 : vector<8x8xf32>
    %31 = math.exp %30 : vector<8x8xf32>
    %cst_12 = arith.constant dense<0.000000e+00> : vector<8xf32>
    %32 = vector.multi_reduction <add>, %31, %cst_12 [1] : vector<8x8xf32> to vector<8xf32>
    %33 = vector.shape_cast %32 : vector<8xf32> to vector<8x1xf32>
    %34 = tpu.reciprocal %33 {approx = true} : vector<8x1xf32> -> vector<8x1xf32>
    %35 = vector.broadcast %34 : vector<8x1xf32> to vector<8x8xf32>
    %36 = arith.mulf %31, %35 : vector<8x8xf32>
    %cst_13 = arith.constant dense<0.000000e+00> : vector<8x32xf32>
    %37 = tpu.matmul %36, %23, %cst_13 {dimension_numbers = #tpu.dot_dimension_numbers<[1], [0], [0], [1], [0, 0, 1, 1], [], []>} : vector<8x8xf32>, vector<8x32xf32>, vector<8x32xf32> -> vector<8x32xf32>
    %38 = vector.extract_strided_slice %3 {offsets = [0, 64], sizes = [8, 32], strides = [1, 1]} : vector<8x384xf32> to vector<8x32xf32>
    %39 = vector.extract_strided_slice %3 {offsets = [0, 192], sizes = [8, 32], strides = [1, 1]} : vector<8x384xf32> to vector<8x32xf32>
    %40 = vector.extract_strided_slice %3 {offsets = [0, 320], sizes = [8, 32], strides = [1, 1]} : vector<8x384xf32> to vector<8x32xf32>
    %cst_14 = arith.constant dense<0.000000e+00> : vector<8x8xf32>
    %41 = tpu.matmul %38, %39, %cst_14 {dimension_numbers = #tpu.dot_dimension_numbers<[1], [1], [0], [0], [0, 0, 1, 0], [], []>} : vector<8x32xf32>, vector<8x32xf32>, vector<8x8xf32> -> vector<8x8xf32>
    %cst_15 = arith.constant 0.176776692 : f32
    %42 = vector.broadcast %cst_15 : f32 to vector<8x8xf32>
    %43 = arith.mulf %41, %42 : vector<8x8xf32>
    %cst_16 = arith.constant dense<0xFF800000> : vector<8xf32>
    %44 = vector.multi_reduction <maximumf>, %43, %cst_16 [1] : vector<8x8xf32> to vector<8xf32>
    %45 = vector.shape_cast %44 : vector<8xf32> to vector<8x1xf32>
    %46 = vector.broadcast %45 : vector<8x1xf32> to vector<8x8xf32>
    %47 = arith.subf %43, %46 : vector<8x8xf32>
    %48 = math.exp %47 : vector<8x8xf32>
    %cst_17 = arith.constant dense<0.000000e+00> : vector<8xf32>
    %49 = vector.multi_reduction <add>, %48, %cst_17 [1] : vector<8x8xf32> to vector<8xf32>
    %50 = vector.shape_cast %49 : vector<8xf32> to vector<8x1xf32>
    %51 = tpu.reciprocal %50 {approx = true} : vector<8x1xf32> -> vector<8x1xf32>
    %52 = vector.broadcast %51 : vector<8x1xf32> to vector<8x8xf32>
    %53 = arith.mulf %48, %52 : vector<8x8xf32>
    %cst_18 = arith.constant dense<0.000000e+00> : vector<8x32xf32>
    %54 = tpu.matmul %53, %40, %cst_18 {dimension_numbers = #tpu.dot_dimension_numbers<[1], [0], [0], [1], [0, 0, 1, 1], [], []>} : vector<8x8xf32>, vector<8x32xf32>, vector<8x32xf32> -> vector<8x32xf32>
    %55 = vector.extract_strided_slice %3 {offsets = [0, 96], sizes = [8, 32], strides = [1, 1]} : vector<8x384xf32> to vector<8x32xf32>
    %56 = vector.extract_strided_slice %3 {offsets = [0, 224], sizes = [8, 32], strides = [1, 1]} : vector<8x384xf32> to vector<8x32xf32>
    %57 = vector.extract_strided_slice %3 {offsets = [0, 352], sizes = [8, 32], strides = [1, 1]} : vector<8x384xf32> to vector<8x32xf32>
    %cst_19 = arith.constant dense<0.000000e+00> : vector<8x8xf32>
    %58 = tpu.matmul %55, %56, %cst_19 {dimension_numbers = #tpu.dot_dimension_numbers<[1], [1], [0], [0], [0, 0, 1, 0], [], []>} : vector<8x32xf32>, vector<8x32xf32>, vector<8x8xf32> -> vector<8x8xf32>
    %cst_20 = arith.constant 0.176776692 : f32
    %59 = vector.broadcast %cst_20 : f32 to vector<8x8xf32>
    %60 = arith.mulf %58, %59 : vector<8x8xf32>
    %cst_21 = arith.constant dense<0xFF800000> : vector<8xf32>
    %61 = vector.multi_reduction <maximumf>, %60, %cst_21 [1] : vector<8x8xf32> to vector<8xf32>
    %62 = vector.shape_cast %61 : vector<8xf32> to vector<8x1xf32>
    %63 = vector.broadcast %62 : vector<8x1xf32> to vector<8x8xf32>
    %64 = arith.subf %60, %63 : vector<8x8xf32>
    %65 = math.exp %64 : vector<8x8xf32>
    %cst_22 = arith.constant dense<0.000000e+00> : vector<8xf32>
    %66 = vector.multi_reduction <add>, %65, %cst_22 [1] : vector<8x8xf32> to vector<8xf32>
    %67 = vector.shape_cast %66 : vector<8xf32> to vector<8x1xf32>
    %68 = tpu.reciprocal %67 {approx = true} : vector<8x1xf32> -> vector<8x1xf32>
    %69 = vector.broadcast %68 : vector<8x1xf32> to vector<8x8xf32>
    %70 = arith.mulf %65, %69 : vector<8x8xf32>
    %cst_23 = arith.constant dense<0.000000e+00> : vector<8x32xf32>
    %71 = tpu.matmul %70, %57, %cst_23 {dimension_numbers = #tpu.dot_dimension_numbers<[1], [0], [0], [1], [0, 0, 1, 1], [], []>} : vector<8x8xf32>, vector<8x32xf32>, vector<8x32xf32> -> vector<8x32xf32>
    %72 = tpu.concatenate %20, %37, %54, %71 in 1 : vector<8x32xf32>, vector<8x32xf32>, vector<8x32xf32>, vector<8x32xf32> -> vector<8x128xf32>
    %c0_24 = arith.constant 0 : index
    %c0_25 = arith.constant 0 : index
    %c0_26 = arith.constant 0 : index
    %73 = vector.load %arg3[%c0_24, %c0_25, %c0_26] : memref<1x8x128xf32, #tpu.memory_space<vmem>>, vector<1x8x128xf32>
    %74 = vector.shape_cast %73 : vector<1x8x128xf32> to vector<8x128xf32>
    %75 = vector.shape_cast %72 : vector<8x128xf32> to vector<1x8x128xf32>
    tpu.vector_store %arg3[%c0_24, %c0_25, %c0_26], %75 {strides = array<i32>} : memref<1x8x128xf32, #tpu.memory_space<vmem>>, vector<1x8x128xf32>,
    return
  }
  func.func @transform_0(%arg0: i32) -> (i32, i32, i32) {
    %c0_i32 = arith.constant 0 : i32
    %c0_i32_0 = arith.constant 0 : i32
    %c0_i32_1 = arith.constant 0 : i32
    return %arg0, %c0_i32, %c0_i32_0 : i32, i32, i32
  }
  func.func @transform_1(%arg0: i32) -> (i32, i32) {
    %c0_i32 = arith.constant 0 : i32
    %c0_i32_0 = arith.constant 0 : i32
    %c0_i32_1 = arith.constant 0 : i32
    return %c0_i32, %c0_i32_0 : i32, i32
  }
  func.func @transform_2(%arg0: i32) -> (i32, i32, i32) {
    %c0_i32 = arith.constant 0 : i32
    %c0_i32_0 = arith.constant 0 : i32
    %c0_i32_1 = arith.constant 0 : i32
    return %arg0, %c0_i32, %c0_i32_0 : i32, i32, i32
  }
}

</mosaic_0001>

<llo_original>
// kernel: tpu_custom_call.1
$region0: #{tpu_custom_call.1}
  #allocation0 [shape = 'u32[]', space=smem, size = 0x4, offset = 0x4, fixed_abs, tag = 'smem constant byte address 0x4 - core index']
  #allocation1 [shape = 'u32[144,128]{1,0:T(1,128)}', space=vmem, size = 0x12000, scoped, tag = 'internal scratch']
  %s0 = inlined_call_operand.hbm [shape: f32[2,8,32], index: 0, kind: input, shape index: {}]
  %s1 = inlined_call_operand.hbm [shape: f32[32,384], index: 1, kind: input, shape index: {}]
  %s2 = inlined_call_operand.hbm [shape: f32[2,8,128], index: 2, kind: output, shape index: {}]
  %s3 = sld [smem:[#allocation0]]
  $region49: #{tpu_custom_call.1} parent=0
    _
  %s5 = ssub.s32 1, %s3
  %s6 = scalar_select 0, %s5, %s3
  $region1: #{tpu_custom_call.1} parent=0
    #allocation2 [shape = 'u8[8192]{0}', space=vmem, size = 0x2000, scoped, tag = 'input window, operand 0']
    #allocation3 [shape = 's32[2]{0}', space=sflag, size = 0x8, scoped, tag = 'scoped memory for tpu_custom_call.1']
    #allocation4 [shape = 's32[2]{0}', space=sflag, size = 0x8, scoped, tag = 'scoped memory for tpu_custom_call.1']
    #allocation5 [shape = 'u8[49152]{0}', space=vmem, size = 0xc000, scoped, tag = 'input window, operand 1, single buffered']
    #allocation6 [shape = 's32[1]{0}', space=sflag, size = 0x4, scoped, tag = 'scoped memory for tpu_custom_call.1']
    #allocation7 [shape = 'u8[8192]{0}', space=vmem, size = 0x2000, scoped, tag = 'output window, operand 0']
    %7 = vsyncpa [#allocation3], 0
    %s8 = scalar_lea.sflag [#allocation3], 1
    %9 = vsyncpa %s8, 0
    %10 = vsyncpa [#allocation6], 0
    %11 = vsyncpa [#allocation4], 0
    %s12 = scalar_lea.sflag [#allocation4], 1
    %13 = vsyncpa %s12, 0
    loop: start=0, step=1, limit=4
    $region2: #{tpu_custom_call.1} parent=1 // loop_pre_header
      _
    $region3: #{tpu_custom_call.1} parent=1 // loop_header
      %s15 = sphi 0, %s19
      %p16 = scmp.ge.s32.totalorder %s15, 4
      %s25 = sphi 0, %s27
      %s28 = sphi 0, %s25
      %s29 = sphi 0, %s28
      %s45 = sphi 0, %s29
      %s49 = sphi 0, %s49
      %s51 = sphi 0, %s49
      %s52 = sphi 0, %s51
      %s66 = sphi 0, %s52
      %s72 = sphi 0, %s74
      %s75 = sphi 0, %s72
      %s76 = sphi 0, %s75
      %s92 = sphi 0, %s76
    $region4: #{tpu_custom_call.1} parent=1 // loop_header_branch
      %18 = sbr.rel (%p16) target = $region8
    $region5: #{tpu_custom_call.1} parent=1 // loop_body
      %s20 = ssub.s32 %s15, 1
      %s21 = ssub.s32 %s15, 2
      %s22 = sadd.s32 %s15, 1
      %s23 = ssub.s32 %s15, %s22
      %p24 = scmp.eq.s32.totalorder %s23, 0
      %s26 = sadd.s32 %s25, 1
      %s27 = scalar_select %p24, %s25, %s26
      %p30 = pneg %p24
      %p31 = scmp.eq.s32.totalorder %s15, 1
      %p32 = por %p30, %p31
      %p33 = scmp.ne.s32.totalorder %s25, %s28
      %p34 = scmp.eq.s32.totalorder %s15, 0
      %p35 = por %p33, %p34
      %p36 = scmp.ne.s32.totalorder %s25, %s28
      %p37 = scmp.eq.s32.totalorder %s20, 1
      %p38 = por %p36, %p37
      %p39 = scmp.ne.s32.totalorder %s28, %s29
      %p40 = scmp.eq.s32.totalorder %s20, 0
      %p41 = por %p39, %p40
      %p42 = scmp.ne.s32.totalorder %s28, %s29
      %p43 = scmp.eq.s32.totalorder %s21, 1
      %p44 = por %p42, %p43
      %p46 = scmp.ne.s32.totalorder %s29, %s45
      %p47 = scmp.eq.s32.totalorder %s21, 0
      %p48 = por %p46, %p47
      %s50 = sadd.s32 %s49, 1
      %p53 = scmp.eq.s32.totalorder %s15, 1
      %p54 = scmp.ne.s32.totalorder %s49, %s51
      %p55 = scmp.eq.s32.totalorder %s15, 0
      %p56 = por %p54, %p55
      %p57 = scmp.ne.s32.totalorder %s49, %s51
      %p58 = scmp.eq.s32.totalorder %s20, 1
      %p59 = por %p57, %p58
      %p60 = scmp.ne.s32.totalorder %s51, %s52
      %p61 = scmp.eq.s32.totalorder %s20, 0
      %p62 = por %p60, %p61
      %p63 = scmp.ne.s32.totalorder %s51, %s52
      %p64 = scmp.eq.s32.totalorder %s21, 1
      %p65 = por %p63, %p64
      %p67 = scmp.ne.s32.totalorder %s52, %s66
      %p68 = scmp.eq.s32.totalorder %s21, 0
      %p69 = por %p67, %p68
      %s70 = ssub.s32 %s15, %s22
      %p71 = scmp.eq.s32.totalorder %s70, 0
      %s73 = sadd.s32 %s72, 1
      %s74 = scalar_select %p71, %s72, %s73
      %p77 = pneg %p71
      %p78 = scmp.eq.s32.totalorder %s15, 1
      %p79 = por %p77, %p78
      %p80 = scmp.ne.s32.totalorder %s72, %s75
      %p81 = scmp.eq.s32.totalorder %s15, 0
      %p82 = por %p80, %p81
      %p83 = scmp.ne.s32.totalorder %s72, %s75
      %p84 = scmp.eq.s32.totalorder %s20, 1
      %p85 = por %p83, %p84
      %p86 = scmp.ne.s32.totalorder %s75, %s76
      %p87 = scmp.eq.s32.totalorder %s20, 0
      %p88 = por %p86, %p87
      %p89 = scmp.ne.s32.totalorder %s75, %s76
      %p90 = scmp.eq.s32.totalorder %s21, 1
      %p91 = por %p89, %p90
      %p93 = scmp.ne.s32.totalorder %s76, %s92
      %p94 = scmp.eq.s32.totalorder %s21, 0
      %p95 = por %p93, %p94
      %p96 = scmp.le.s32.totalorder 1, %s15
      %p97 = scmp.lt.s32.totalorder %s15, 3
      %p98 = pnand %p96, %p97
      %p99 = pneg %p98
      // Predicated region
      $region9: #{tpu_custom_call.1} parent=5 // pred_check
        _
      $region10: #{tpu_custom_call.1} parent=5 // pred_check_branch
        %101 = sbr.rel (%p98) target = $region12
      $region11: #{tpu_custom_call.1} parent=5 // pred_region
        %s102 = ssub.s32 %s15, 1
        // Predicated region
        $region13: #{tpu_custom_call.1} parent=11 // pred_check
          %p103 = pneg %p62
        $region14: #{tpu_custom_call.1} parent=11 // pred_check_branch
          %105 = sbr.rel (%p103) target = $region16
        $region15: #{tpu_custom_call.1} parent=11 // pred_region
          %s107 = ssub.s32 1536, 1536
          %108 = vsyncadd [#allocation6], %s107
          %s109 = sshll.u32 [#allocation5], 4
          %s110 = int_to_ptr.vmem [resolvable:$true] %s109
          %115 = dma.hbm_to_vmem [thread:$0]  %s1, 1536, %s110, [#allocation6], 384, 384, 24
        $region16: #{tpu_custom_call.1} parent=11 // pred_fallthru
          _
      $region12: #{tpu_custom_call.1} parent=5 // pred_fallthru
        _
      %p116 = scmp.lt.s32.totalorder %s15, 2
      // Predicated region
      $region17: #{tpu_custom_call.1} parent=5 // pred_check
        %p117 = pneg %p116
      $region18: #{tpu_custom_call.1} parent=5 // pred_check_branch
        %119 = sbr.rel (%p117) target = $region20
      $region19: #{tpu_custom_call.1} parent=5 // pred_region
        // Predicated region
        $region21: #{tpu_custom_call.1} parent=19 // pred_check
          %p120 = pneg %p35
        $region22: #{tpu_custom_call.1} parent=19 // pred_check_branch
          %122 = sbr.rel (%p120) target = $region24
        $region23: #{tpu_custom_call.1} parent=19 // pred_region
          %s123 = sand.u32 %s25, 1
          %s124 = scalar_lea.sflag [#allocation3], %s123
          %s125 = sand.u32 %s25, 1
          %s126 = smul.addr %s125, 8
          %s127 = scalar_lea.vmem [#allocation2], %s126
          %s129 = ssub.s32 128, 128
          %130 = vsyncadd %s124, %s129
          %s131 = smul.addr %s15, 128
          %s132 = scalar_lea.hbm %s0, %s131
          %s134 = sshll.u32 %s127, 4
          %s135 = int_to_ptr.vmem [resolvable:$true] %s134
          %137 = dma.hbm_to_vmem [thread:$0]  %s132, 128, %s135, %s124
        $region24: #{tpu_custom_call.1} parent=19 // pred_fallthru
          _
      $region20: #{tpu_custom_call.1} parent=5 // pred_fallthru
        _
      %p138 = scmp.le.s32.totalorder 1, %s15
      %p139 = scmp.lt.s32.totalorder %s15, 3
      %p140 = pnand %p138, %p139
      %p141 = pneg %p140
      // Predicated region
      $region25: #{tpu_custom_call.1} parent=5 // pred_check
        _
      $region26: #{tpu_custom_call.1} parent=5 // pred_check_branch
        %143 = sbr.rel (%p140) target = $region28
      $region27: #{tpu_custom_call.1} parent=5 // pred_region
        %s144 = ssub.s32 %s15, 1
        %s145 = sand.u32 %s28, 1
        %s146 = scalar_lea.sflag [#allocation3], %s145
        %s147 = sand.u32 %s28, 1
        %s148 = smul.addr %s147, 8
        %s149 = scalar_lea.vmem [#allocation2], %s148
        // Predicated region
        $region29: #{tpu_custom_call.1} parent=27 // pred_check
          %p150 = pneg %p41
        $region30: #{tpu_custom_call.1} parent=27 // pred_check_branch
          %152 = sbr.rel (%p150) target = $region32
        $region31: #{tpu_custom_call.1} parent=27 // pred_region
          %153 = dma.done %s146, 128
        $region32: #{tpu_custom_call.1} parent=27 // pred_fallthru
          _
        // Predicated region
        $region33: #{tpu_custom_call.1} parent=27 // pred_check
          %p154 = pneg %p62
        $region34: #{tpu_custom_call.1} parent=27 // pred_check_branch
          %156 = sbr.rel (%p154) target = $region36
        $region35: #{tpu_custom_call.1} parent=27 // pred_region
          %157 = dma.done [#allocation6], 1536
        $region36: #{tpu_custom_call.1} parent=27 // pred_fallthru
          _
        %s158 = sand.u32 %s28, 1
        %s159 = scalar_lea.sflag [#allocation3], %s158
        %s160 = sand.u32 %s28, 1
        %s161 = smul.addr %s160, 8
        %s162 = scalar_lea.vmem [#allocation2], %s161
        %p163 = pneg %p41
        %p164 = pneg %p38
        %p165 = pneg %p62
        %p166 = pneg %p59
        %p167 = pneg %p88
        %p168 = pneg %p85
        %s169 = sand.u32 %s75, 1
        %s170 = scalar_lea.sflag [#allocation4], %s169
        %s171 = sand.u32 %s75, 1
        %s172 = smul.addr %s171, 8
        %s173 = scalar_lea.vmem [#allocation7], %s172
        %v174 = vld [vmem:[%s149] sm:$0xff]
        %v175 = vld [vmem:[#allocation5] sm:$0xff]
        %v176 = vld [vmem:[#allocation5 + $0x8] sm:$0xff]
        %v177 = vld [vmem:[#allocation5 + $0x10] sm:$0xff]
        %v178 = vld [vmem:[#allocation5 + $0x18] sm:$0xff]
        %v179 = vld [vmem:[#allocation5 + $0x20] sm:$0xff]
        %v180 = vld [vmem:[#allocation5 + $0x28] sm:$0xff]
        %v181 = vld [vmem:[#allocation5 + $0x30] sm:$0xff]
        %v182 = vld [vmem:[#allocation5 + $0x38] sm:$0xff]
        %v183 = vld [vmem:[#allocation5 + $0x40] sm:$0xff]
        %v184 = vld [vmem:[#allocation5 + $0x48] sm:$0xff]
        %v185 = vld [vmem:[#allocation5 + $0x50] sm:$0xff]
        %v186 = vld [vmem:[#allocation5 + $0x58] sm:$0xff]
        %vm187 = vcmask 261120
        %v189 = vsel %vm187, %v174, 0
        %191 = vmatprep.subr.mxu0 %v176
        %192 = vmatpush1.msra.mxu0 %v175
        %193 = vmatprep.subr.mxu0 %v179
        %194 = vmatpush1.msra.mxu0 %v178
        %195 = vmatprep.subr.mxu0 %v182
        %196 = vmatpush1.msra.mxu0 %v181
        %197 = vmatprep.subr.mxu0 %v185
        %198 = vmatpush1.msra.mxu0 %v184
        %199 = vmatprep.subr.mxu0 0.0
        %200 = vmatpush1.msra.mxu0 0.0
        %201 = vmatprep.subr.mxu0 0.0
        %202 = vmatpush1.msra.mxu0 0.0
        %203 = vmatprep.subr.mxu0 0.0
        %204 = vmatpush1.msra.mxu0 0.0
        %205 = vmatprep.subr.mxu0 0.0
        %206 = vmatpush1.msra.mxu0 0.0
        %207 = vmatprep.subr.mxu0 0.0
        %208 = vmatpush1.msra.mxu0 0.0
        %209 = vmatprep.subr.mxu0 0.0
        %210 = vmatpush1.msra.mxu0 0.0
        %211 = vmatprep.subr.mxu0 0.0
        %212 = vmatpush1.msra.mxu0 0.0
        %213 = vmatprep.subr.mxu0 0.0
        %214 = vmatpush1.msra.mxu0 0.0
        %215 = vmatprep.subr.mxu0 0.0
        %216 = vmatpush1.msra.mxu0 0.0
        %217 = vmatprep.subr.mxu0 0.0
        %218 = vmatpush1.msra.mxu0 0.0
        %219 = vmatprep.subr.mxu0 0.0
        %220 = vmatpush1.msra.mxu0 0.0
        %221 = vmatprep.subr.mxu0 0.0
        %222 = vmatpush1.msra.mxu0 0.0
        %223 = vmatprep.subr.mxu0 0.0
        %224 = vmatpush1.msra.mxu0 0.0
        %225 = vmatprep.subr.mxu0 0.0
        %226 = vmatpush1.msra.mxu0 0.0
        %227 = vmatprep.subr.mxu0 0.0
        %228 = vmatpush1.msra.mxu0 0.0
        %229 = vmatprep.subr.mxu0 0.0
        %230 = vmatpush1.msra.mxu0 0.0
        %231 = vmatprep.subr.mxu0 0.0
        %232 = vmatpush1.msra.mxu0 0.0
        %233 = vmatprep.subr.mxu0 0.0
        %234 = vmatpush1.msra.mxu0 0.0
        %235 = vmatprep.subr.mxu0 0.0
        %236 = vmatpush1.msra.mxu0 0.0
        %237 = vmatprep.subr.mxu0 0.0
        %238 = vmatpush1.msra.mxu0 0.0
        %239 = vmatprep.subr.mxu0 0.0
        %240 = vmatpush1.msra.mxu0 0.0
        %241 = vmatprep.subr.mxu0 0.0
        %242 = vmatpush1.msra.mxu0 0.0
        %243 = vmatprep.subr.mxu0 0.0
        %244 = vmatpush1.msra.mxu0 0.0
        %245 = vmatprep.subr.mxu0 0.0
        %246 = vmatpush1.msra.mxu0 0.0
        %247 = vmatprep.subr.mxu0 0.0
        %248 = vmatpush1.msra.mxu0 0.0
        %249 = vmatprep.subr.mxu0 0.0
        %250 = vmatpush1.msra.mxu0 0.0
        %251 = vmatprep.subr.mxu0 0.0
        %252 = vmatpush1.msra.mxu0 0.0
        %253 = vmatprep.subr.mxu0 0.0
        %254 = vmatpush1.msra.mxu0 0.0
        %255 = vmatprep.mubr.f32.mxu0 0.0
        %256 = vmatmul.mubr.f32.gmra.mrb[0].mxu0 %v189
        %v257 = vpop.f32.mrb[0].mxu0
        %v258 = vadd.f32 0.0, %v257
        %v259 = vpop.f32.mrb[0].mxu0
        %v260 = vadd.f32 0.0, %v259
        %261 = vdwg.mxu0
        %262 = vmatprep.subr.mxu0 0.0
        %263 = vmatpush1.msra.mxu0 %v177
        %264 = vmatprep.subr.mxu0 0.0
        %265 = vmatpush1.msra.mxu0 %v180
        %266 = vmatprep.subr.mxu0 0.0
        %267 = vmatpush1.msra.mxu0 %v183
        %268 = vmatprep.subr.mxu0 0.0
        %269 = vmatpush1.msra.mxu0 %v186
        %270 = vmatprep.subr.mxu0 0.0
        %271 = vmatpush1.msra.mxu0 0.0
        %272 = vmatprep.subr.mxu0 0.0
        %273 = vmatpush1.msra.mxu0 0.0
        %274 = vmatprep.subr.mxu0 0.0
        %275 = vmatpush1.msra.mxu0 0.0
        %276 = vmatprep.subr.mxu0 0.0
        %277 = vmatpush1.msra.mxu0 0.0
        %278 = vmatprep.subr.mxu0 0.0
        %279 = vmatpush1.msra.mxu0 0.0
        %280 = vmatprep.subr.mxu0 0.0
        %281 = vmatpush1.msra.mxu0 0.0
        %282 = vmatprep.subr.mxu0 0.0
        %283 = vmatpush1.msra.mxu0 0.0
        %284 = vmatprep.subr.mxu0 0.0
        %285 = vmatpush1.msra.mxu0 0.0
        %286 = vmatprep.subr.mxu0 0.0
        %287 = vmatpush1.msra.mxu0 0.0
        %288 = vmatprep.subr.mxu0 0.0
        %289 = vmatpush1.msra.mxu0 0.0
        %290 = vmatprep.subr.mxu0 0.0
        %291 = vmatpush1.msra.mxu0 0.0
        %292 = vmatprep.subr.mxu0 0.0
        %293 = vmatpush1.msra.mxu0 0.0
        %294 = vmatprep.subr.mxu0 0.0
        %295 = vmatpush1.msra.mxu0 0.0
        %296 = vmatprep.subr.mxu0 0.0
        %297 = vmatpush1.msra.mxu0 0.0
        %298 = vmatprep.subr.mxu0 0.0
        %299 = vmatpush1.msra.mxu0 0.0
        %300 = vmatprep.subr.mxu0 0.0
        %301 = vmatpush1.msra.mxu0 0.0
        %302 = vmatprep.subr.mxu0 0.0
        %303 = vmatpush1.msra.mxu0 0.0
        %304 = vmatprep.subr.mxu0 0.0
        %305 = vmatpush1.msra.mxu0 0.0
        %306 = vmatprep.subr.mxu0 0.0
        %307 = vmatpush1.msra.mxu0 0.0
        %308 = vmatprep.subr.mxu0 0.0
        %309 = vmatpush1.msra.mxu0 0.0
        %310 = vmatprep.subr.mxu0 0.0
        %311 = vmatpush1.msra.mxu0 0.0
        %312 = vmatprep.subr.mxu0 0.0
        %313 = vmatpush1.msra.mxu0 0.0
        %314 = vmatprep.subr.mxu0 0.0
        %315 = vmatpush1.msra.mxu0 0.0
        %316 = vmatprep.subr.mxu0 0.0
        %317 = vmatpush1.msra.mxu0 0.0
        %318 = vmatprep.subr.mxu0 0.0
        %319 = vmatpush1.msra.mxu0 0.0
        %320 = vmatprep.subr.mxu0 0.0
        %321 = vmatpush1.msra.mxu0 0.0
        %322 = vmatprep.subr.mxu0 0.0
        %323 = vmatpush1.msra.mxu0 0.0
        %324 = vmatprep.subr.mxu0 0.0
        %325 = vmatpush1.msra.mxu0 0.0
        %326 = vmatprep.mubr.f32.mxu0 0.0
        %327 = vmatmul.mubr.f32.gmra.mrb[0].mxu0 %v189
        %v328 = vpop.f32.mrb[0].mxu0
        %v329 = vadd.f32 0.0, %v328
        %v330 = vpop.f32.mrb[0].mxu0
        %331 = vdwg.mxu0
        %v333 = vsel %vm187, %v258, 0
        %v336 = vsel %vm187, %v260, 0
        %338 = vmatprep.subr.mxu0 0.0
        %339 = vmatpush1.xpose.msra.mxu0 %v336
        %340 = vmatprep.subr.mxu0 0.0
        %341 = vmatpush1.xpose.msra.mxu0 0.0
        %342 = vmatprep.subr.mxu0 0.0
        %343 = vmatpush1.xpose.msra.mxu0 0.0
        %344 = vmatprep.subr.mxu0 0.0
        %345 = vmatpush1.xpose.msra.mxu0 0.0
        %346 = vmatprep.subr.mxu0 0.0
        %347 = vmatpush1.xpose.msra.mxu0 0.0
        %348 = vmatprep.subr.mxu0 0.0
        %349 = vmatpush1.xpose.msra.mxu0 0.0
        %350 = vmatprep.subr.mxu0 0.0
        %351 = vmatpush1.xpose.msra.mxu0 0.0
        %352 = vmatprep.subr.mxu0 0.0
        %353 = vmatpush1.xpose.msra.mxu0 0.0
        %354 = vmatprep.subr.mxu0 0.0
        %355 = vmatpush1.xpose.msra.mxu0 0.0
        %356 = vmatprep.subr.mxu0 0.0
        %357 = vmatpush1.xpose.msra.mxu0 0.0
        %358 = vmatprep.subr.mxu0 0.0
        %359 = vmatpush1.xpose.msra.mxu0 0.0
        %360 = vmatprep.subr.mxu0 0.0
        %361 = vmatpush1.xpose.msra.mxu0 0.0
        %362 = vmatprep.subr.mxu0 0.0
        %363 = vmatpush1.xpose.msra.mxu0 0.0
        %364 = vmatprep.subr.mxu0 0.0
        %365 = vmatpush1.xpose.msra.mxu0 0.0
        %366 = vmatprep.subr.mxu0 0.0
        %367 = vmatpush1.xpose.msra.mxu0 0.0
        %368 = vmatprep.subr.mxu0 0.0
        %369 = vmatpush1.xpose.msra.mxu0 0.0
        %370 = vmatprep.subr.mxu0 0.0
        %371 = vmatpush1.xpose.msra.mxu0 0.0
        %372 = vmatprep.subr.mxu0 0.0
        %373 = vmatpush1.xpose.msra.mxu0 0.0
        %374 = vmatprep.subr.mxu0 0.0
        %375 = vmatpush1.xpose.msra.mxu0 0.0
        %376 = vmatprep.subr.mxu0 0.0
        %377 = vmatpush1.xpose.msra.mxu0 0.0
        %378 = vmatprep.subr.mxu0 0.0
        %379 = vmatpush1.xpose.msra.mxu0 0.0
        %380 = vmatprep.subr.mxu0 0.0
        %381 = vmatpush1.xpose.msra.mxu0 0.0
        %382 = vmatprep.subr.mxu0 0.0
        %383 = vmatpush1.xpose.msra.mxu0 0.0
        %384 = vmatprep.subr.mxu0 0.0
        %385 = vmatpush1.xpose.msra.mxu0 0.0
        %386 = vmatprep.subr.mxu0 0.0
        %387 = vmatpush1.xpose.msra.mxu0 0.0
        %388 = vmatprep.subr.mxu0 0.0
        %389 = vmatpush1.xpose.msra.mxu0 0.0
        %390 = vmatprep.subr.mxu0 0.0
        %391 = vmatpush1.xpose.msra.mxu0 0.0
        %392 = vmatprep.subr.mxu0 0.0
        %393 = vmatpush1.xpose.msra.mxu0 0.0
        %394 = vmatprep.subr.mxu0 0.0
        %395 = vmatpush1.xpose.msra.mxu0 0.0
        %396 = vmatprep.subr.mxu0 0.0
        %397 = vmatpush1.xpose.msra.mxu0 0.0
        %398 = vmatprep.subr.mxu0 0.0
        %399 = vmatpush1.xpose.msra.mxu0 0.0
        %400 = vmatprep.subr.mxu0 0.0
        %401 = vmatpush1.xpose.msra.mxu0 0.0
        %402 = vmatprep.mubr.f32.mxu0 0.0
        %403 = vmatmul.mubr.f32.gmra.mrb[0].mxu0 %v333
        %v404 = vpop.f32.mrb[0].mxu0
        %v405 = vadd.f32 0.0, %v404
        %v406 = vpop.f32.mrb[0].mxu0
        %407 = vdwg.mxu0
        %v408 = vmul.f32 %v405, 0.17677669
        %vm409 = vcmask 64512
        %v410 = vsel %vm409, %v408, -inf
        %411 = vmax.xlane.f32.xlu0 %v410
        %v412 = vpop.xlane.xlu0 %411
        %v413 = vsub.f32 %v408, %v412
        %v414 = vmul.f32 %v413, 1.442695
        %v415 = vpow.pop %v414
        %v416 = vsel %vm409, %v415, 0.0
        %417 = vadd.xlane.f32.xlu0 %v416
        %v418 = vpop.xlane.xlu0 %417
        %v419 = vrcp.pop %v418
        %v420 = vmul.f32 %v415, %v419
        %v422 = vsel %vm409, %v420, 0
        %424 = vmatprep.subr.mxu0 0.0
        %425 = vmatpush1.msra.mxu0 %v329
        %426 = vmatprep.subr.mxu0 0.0
        %427 = vmatpush1.msra.mxu0 0.0
        %428 = vmatprep.subr.mxu0 0.0
        %429 = vmatpush1.msra.mxu0 0.0
        %430 = vmatprep.subr.mxu0 0.0
        %431 = vmatpush1.msra.mxu0 0.0
        %432 = vmatprep.subr.mxu0 0.0
        %433 = vmatpush1.msra.mxu0 0.0
        %434 = vmatprep.subr.mxu0 0.0
        %435 = vmatpush1.msra.mxu0 0.0
        %436 = vmatprep.subr.mxu0 0.0
        %437 = vmatpush1.msra.mxu0 0.0
        %438 = vmatprep.subr.mxu0 0.0
        %439 = vmatpush1.msra.mxu0 0.0
        %440 = vmatprep.subr.mxu0 0.0
        %441 = vmatpush1.msra.mxu0 0.0
        %442 = vmatprep.subr.mxu0 0.0
        %443 = vmatpush1.msra.mxu0 0.0
        %444 = vmatprep.subr.mxu0 0.0
        %445 = vmatpush1.msra.mxu0 0.0
        %446 = vmatprep.subr.mxu0 0.0
        %447 = vmatpush1.msra.mxu0 0.0
        %448 = vmatprep.subr.mxu0 0.0
        %449 = vmatpush1.msra.mxu0 0.0
        %450 = vmatprep.subr.mxu0 0.0
        %451 = vmatpush1.msra.mxu0 0.0
        %452 = vmatprep.subr.mxu0 0.0
        %453 = vmatpush1.msra.mxu0 0.0
        %454 = vmatprep.subr.mxu0 0.0
        %455 = vmatpush1.msra.mxu0 0.0
        %456 = vmatprep.subr.mxu0 0.0
        %457 = vmatpush1.msra.mxu0 0.0
        %458 = vmatprep.subr.mxu0 0.0
        %459 = vmatpush1.msra.mxu0 0.0
        %460 = vmatprep.subr.mxu0 0.0
        %461 = vmatpush1.msra.mxu0 0.0
        %462 = vmatprep.subr.mxu0 0.0
        %463 = vmatpush1.msra.mxu0 0.0
        %464 = vmatprep.subr.mxu0 0.0
        %465 = vmatpush1.msra.mxu0 0.0
        %466 = vmatprep.subr.mxu0 0.0
        %467 = vmatpush1.msra.mxu0 0.0
        %468 = vmatprep.subr.mxu0 0.0
        %469 = vmatpush1.msra.mxu0 0.0
        %470 = vmatprep.subr.mxu0 0.0
        %471 = vmatpush1.msra.mxu0 0.0
        %472 = vmatprep.subr.mxu0 0.0
        %473 = vmatpush1.msra.mxu0 0.0
        %474 = vmatprep.subr.mxu0 0.0
        %475 = vmatpush1.msra.mxu0 0.0
        %476 = vmatprep.subr.mxu0 0.0
        %477 = vmatpush1.msra.mxu0 0.0
        %478 = vmatprep.subr.mxu0 0.0
        %479 = vmatpush1.msra.mxu0 0.0
        %480 = vmatprep.subr.mxu0 0.0
        %481 = vmatpush1.msra.mxu0 0.0
        %482 = vmatprep.subr.mxu0 0.0
        %483 = vmatpush1.msra.mxu0 0.0
        %484 = vmatprep.subr.mxu0 0.0
        %485 = vmatpush1.msra.mxu0 0.0
        %486 = vmatprep.subr.mxu0 0.0
        %487 = vmatpush1.msra.mxu0 0.0
        %488 = vmatprep.mubr.f32.mxu0 0.0
        %489 = vmatmul.mubr.f32.gmra.mrb[0].mxu0 %v422
        %v490 = vpop.f32.mrb[0].mxu0
        %v491 = vadd.f32 0.0, %v490
        %v492 = vpop.f32.mrb[0].mxu0
        %493 = vdwg.mxu0
        %494 = vrot.lane.b32.xlu0 %v258, 96
        %v495 = vpop.permute.xlu0 %494
        %496 = vrot.lane.b32.xlu0 %v260, 96
        %v497 = vpop.permute.xlu0 %496
        %v498 = vsel %vm187, %v495, 0
        %v500 = vsel %vm187, %v497, 0
        %502 = vmatprep.subr.mxu0 0.0
        %503 = vmatpush1.xpose.msra.mxu0 %v500
        %504 = vmatprep.subr.mxu0 0.0
        %505 = vmatpush1.xpose.msra.mxu0 0.0
        %506 = vmatprep.subr.mxu0 0.0
        %507 = vmatpush1.xpose.msra.mxu0 0.0
        %508 = vmatprep.subr.mxu0 0.0
        %509 = vmatpush1.xpose.msra.mxu0 0.0
        %510 = vmatprep.subr.mxu0 0.0
        %511 = vmatpush1.xpose.msra.mxu0 0.0
        %512 = vmatprep.subr.mxu0 0.0
        %513 = vmatpush1.xpose.msra.mxu0 0.0
        %514 = vmatprep.subr.mxu0 0.0
        %515 = vmatpush1.xpose.msra.mxu0 0.0
        %516 = vmatprep.subr.mxu0 0.0
        %517 = vmatpush1.xpose.msra.mxu0 0.0
        %518 = vmatprep.subr.mxu0 0.0
        %519 = vmatpush1.xpose.msra.mxu0 0.0
        %520 = vmatprep.subr.mxu0 0.0
        %521 = vmatpush1.xpose.msra.mxu0 0.0
        %522 = vmatprep.subr.mxu0 0.0
        %523 = vmatpush1.xpose.msra.mxu0 0.0
        %524 = vmatprep.subr.mxu0 0.0
        %525 = vmatpush1.xpose.msra.mxu0 0.0
        %526 = vmatprep.subr.mxu0 0.0
        %527 = vmatpush1.xpose.msra.mxu0 0.0
        %528 = vmatprep.subr.mxu0 0.0
        %529 = vmatpush1.xpose.msra.mxu0 0.0
        %530 = vmatprep.subr.mxu0 0.0
        %531 = vmatpush1.xpose.msra.mxu0 0.0
        %532 = vmatprep.subr.mxu0 0.0
        %533 = vmatpush1.xpose.msra.mxu0 0.0
        %534 = vmatprep.subr.mxu0 0.0
        %535 = vmatpush1.xpose.msra.mxu0 0.0
        %536 = vmatprep.subr.mxu0 0.0
        %537 = vmatpush1.xpose.msra.mxu0 0.0
        %538 = vmatprep.subr.mxu0 0.0
        %539 = vmatpush1.xpose.msra.mxu0 0.0
        %540 = vmatprep.subr.mxu0 0.0
        %541 = vmatpush1.xpose.msra.mxu0 0.0
        %542 = vmatprep.subr.mxu0 0.0
        %543 = vmatpush1.xpose.msra.mxu0 0.0
        %544 = vmatprep.subr.mxu0 0.0
        %545 = vmatpush1.xpose.msra.mxu0 0.0
        %546 = vmatprep.subr.mxu0 0.0
        %547 = vmatpush1.xpose.msra.mxu0 0.0
        %548 = vmatprep.subr.mxu0 0.0
        %549 = vmatpush1.xpose.msra.mxu0 0.0
        %550 = vmatprep.subr.mxu0 0.0
        %551 = vmatpush1.xpose.msra.mxu0 0.0
        %552 = vmatprep.subr.mxu0 0.0
        %553 = vmatpush1.xpose.msra.mxu0 0.0
        %554 = vmatprep.subr.mxu0 0.0
        %555 = vmatpush1.xpose.msra.mxu0 0.0
        %556 = vmatprep.subr.mxu0 0.0
        %557 = vmatpush1.xpose.msra.mxu0 0.0
        %558 = vmatprep.subr.mxu0 0.0
        %559 = vmatpush1.xpose.msra.mxu0 0.0
        %560 = vmatprep.subr.mxu0 0.0
        %561 = vmatpush1.xpose.msra.mxu0 0.0
        %562 = vmatprep.subr.mxu0 0.0
        %563 = vmatpush1.xpose.msra.mxu0 0.0
        %564 = vmatprep.subr.mxu0 0.0
        %565 = vmatpush1.xpose.msra.mxu0 0.0
        %566 = vmatprep.mubr.f32.mxu0 0.0
        %567 = vmatmul.mubr.f32.gmra.mrb[0].mxu0 %v498
        %v568 = vpop.f32.mrb[0].mxu0
        %v569 = vadd.f32 0.0, %v568
        %v570 = vpop.f32.mrb[0].mxu0
        %571 = vdwg.mxu0
        %v572 = vmul.f32 %v569, 0.17677669
        %v573 = vsel %vm409, %v572, -inf
        %574 = vmax.xlane.f32.xlu0 %v573
        %v575 = vpop.xlane.xlu0 %574
        %v576 = vsub.f32 %v572, %v575
        %v577 = vmul.f32 %v576, 1.442695
        %v578 = vpow.pop %v577
        %v579 = vsel %vm409, %v578, 0.0
        %580 = vadd.xlane.f32.xlu0 %v579
        %v581 = vpop.xlane.xlu0 %580
        %v582 = vrcp.pop %v581
        %v583 = vmul.f32 %v578, %v582
        %585 = vrot.lane.b32.xlu0 %v329, 96
        %v586 = vpop.permute.xlu0 %585
        %v589 = vsel %vm409, %v583, 0
        %591 = vmatprep.subr.mxu0 0.0
        %592 = vmatpush1.msra.mxu0 %v586
        %593 = vmatprep.subr.mxu0 0.0
        %594 = vmatpush1.msra.mxu0 0.0
        %595 = vmatprep.subr.mxu0 0.0
        %596 = vmatpush1.msra.mxu0 0.0
        %597 = vmatprep.subr.mxu0 0.0
        %598 = vmatpush1.msra.mxu0 0.0
        %599 = vmatprep.subr.mxu0 0.0
        %600 = vmatpush1.msra.mxu0 0.0
        %601 = vmatprep.subr.mxu0 0.0
        %602 = vmatpush1.msra.mxu0 0.0
        %603 = vmatprep.subr.mxu0 0.0
        %604 = vmatpush1.msra.mxu0 0.0
        %605 = vmatprep.subr.mxu0 0.0
        %606 = vmatpush1.msra.mxu0 0.0
        %607 = vmatprep.subr.mxu0 0.0
        %608 = vmatpush1.msra.mxu0 0.0
        %609 = vmatprep.subr.mxu0 0.0
        %610 = vmatpush1.msra.mxu0 0.0
        %611 = vmatprep.subr.mxu0 0.0
        %612 = vmatpush1.msra.mxu0 0.0
        %613 = vmatprep.subr.mxu0 0.0
        %614 = vmatpush1.msra.mxu0 0.0
        %615 = vmatprep.subr.mxu0 0.0
        %616 = vmatpush1.msra.mxu0 0.0
        %617 = vmatprep.subr.mxu0 0.0
        %618 = vmatpush1.msra.mxu0 0.0
        %619 = vmatprep.subr.mxu0 0.0
        %620 = vmatpush1.msra.mxu0 0.0
        %621 = vmatprep.subr.mxu0 0.0
        %622 = vmatpush1.msra.mxu0 0.0
        %623 = vmatprep.subr.mxu0 0.0
        %624 = vmatpush1.msra.mxu0 0.0
        %625 = vmatprep.subr.mxu0 0.0
        %626 = vmatpush1.msra.mxu0 0.0
        %627 = vmatprep.subr.mxu0 0.0
        %628 = vmatpush1.msra.mxu0 0.0
        %629 = vmatprep.subr.mxu0 0.0
        %630 = vmatpush1.msra.mxu0 0.0
        %631 = vmatprep.subr.mxu0 0.0
        %632 = vmatpush1.msra.mxu0 0.0
        %633 = vmatprep.subr.mxu0 0.0
        %634 = vmatpush1.msra.mxu0 0.0
        %635 = vmatprep.subr.mxu0 0.0
        %636 = vmatpush1.msra.mxu0 0.0
        %637 = vmatprep.subr.mxu0 0.0
        %638 = vmatpush1.msra.mxu0 0.0
        %639 = vmatprep.subr.mxu0 0.0
        %640 = vmatpush1.msra.mxu0 0.0
        %641 = vmatprep.subr.mxu0 0.0
        %642 = vmatpush1.msra.mxu0 0.0
        %643 = vmatprep.subr.mxu0 0.0
        %644 = vmatpush1.msra.mxu0 0.0
        %645 = vmatprep.subr.mxu0 0.0
        %646 = vmatpush1.msra.mxu0 0.0
        %647 = vmatprep.subr.mxu0 0.0
        %648 = vmatpush1.msra.mxu0 0.0
        %649 = vmatprep.subr.mxu0 0.0
        %650 = vmatpush1.msra.mxu0 0.0
        %651 = vmatprep.subr.mxu0 0.0
        %652 = vmatpush1.msra.mxu0 0.0
        %653 = vmatprep.subr.mxu0 0.0
        %654 = vmatpush1.msra.mxu0 0.0
        %655 = vmatprep.mubr.f32.mxu0 0.0
        %656 = vmatmul.mubr.f32.gmra.mrb[0].mxu0 %v589
        %v657 = vpop.f32.mrb[0].mxu0
        %v658 = vadd.f32 0.0, %v657
        %v659 = vpop.f32.mrb[0].mxu0
        %660 = vdwg.mxu0
        %661 = vrot.lane.b32.xlu0 %v258, 64
        %v662 = vpop.permute.xlu0 %661
        %663 = vrot.lane.b32.xlu0 %v260, 64
        %v664 = vpop.permute.xlu0 %663
        %v665 = vsel %vm187, %v662, 0
        %v667 = vsel %vm187, %v664, 0
        %669 = vmatprep.subr.mxu0 0.0
        %670 = vmatpush1.xpose.msra.mxu0 %v667
        %671 = vmatprep.subr.mxu0 0.0
        %672 = vmatpush1.xpose.msra.mxu0 0.0
        %673 = vmatprep.subr.mxu0 0.0
        %674 = vmatpush1.xpose.msra.mxu0 0.0
        %675 = vmatprep.subr.mxu0 0.0
        %676 = vmatpush1.xpose.msra.mxu0 0.0
        %677 = vmatprep.subr.mxu0 0.0
        %678 = vmatpush1.xpose.msra.mxu0 0.0
        %679 = vmatprep.subr.mxu0 0.0
        %680 = vmatpush1.xpose.msra.mxu0 0.0
        %681 = vmatprep.subr.mxu0 0.0
        %682 = vmatpush1.xpose.msra.mxu0 0.0
        %683 = vmatprep.subr.mxu0 0.0
        %684 = vmatpush1.xpose.msra.mxu0 0.0
        %685 = vmatprep.subr.mxu0 0.0
        %686 = vmatpush1.xpose.msra.mxu0 0.0
        %687 = vmatprep.subr.mxu0 0.0
        %688 = vmatpush1.xpose.msra.mxu0 0.0
        %689 = vmatprep.subr.mxu0 0.0
        %690 = vmatpush1.xpose.msra.mxu0 0.0
        %691 = vmatprep.subr.mxu0 0.0
        %692 = vmatpush1.xpose.msra.mxu0 0.0
        %693 = vmatprep.subr.mxu0 0.0
        %694 = vmatpush1.xpose.msra.mxu0 0.0
        %695 = vmatprep.subr.mxu0 0.0
        %696 = vmatpush1.xpose.msra.mxu0 0.0
        %697 = vmatprep.subr.mxu0 0.0
        %698 = vmatpush1.xpose.msra.mxu0 0.0
        %699 = vmatprep.subr.mxu0 0.0
        %700 = vmatpush1.xpose.msra.mxu0 0.0
        %701 = vmatprep.subr.mxu0 0.0
        %702 = vmatpush1.xpose.msra.mxu0 0.0
        %703 = vmatprep.subr.mxu0 0.0
        %704 = vmatpush1.xpose.msra.mxu0 0.0
        %705 = vmatprep.subr.mxu0 0.0
        %706 = vmatpush1.xpose.msra.mxu0 0.0
        %707 = vmatprep.subr.mxu0 0.0
        %708 = vmatpush1.xpose.msra.mxu0 0.0
        %709 = vmatprep.subr.mxu0 0.0
        %710 = vmatpush1.xpose.msra.mxu0 0.0
        %711 = vmatprep.subr.mxu0 0.0
        %712 = vmatpush1.xpose.msra.mxu0 0.0
        %713 = vmatprep.subr.mxu0 0.0
        %714 = vmatpush1.xpose.msra.mxu0 0.0
        %715 = vmatprep.subr.mxu0 0.0
        %716 = vmatpush1.xpose.msra.mxu0 0.0
        %717 = vmatprep.subr.mxu0 0.0
        %718 = vmatpush1.xpose.msra.mxu0 0.0
        %719 = vmatprep.subr.mxu0 0.0
        %720 = vmatpush1.xpose.msra.mxu0 0.0
        %721 = vmatprep.subr.mxu0 0.0
        %722 = vmatpush1.xpose.msra.mxu0 0.0
        %723 = vmatprep.subr.mxu0 0.0
        %724 = vmatpush1.xpose.msra.mxu0 0.0
        %725 = vmatprep.subr.mxu0 0.0
        %726 = vmatpush1.xpose.msra.mxu0 0.0
        %727 = vmatprep.subr.mxu0 0.0
        %728 = vmatpush1.xpose.msra.mxu0 0.0
        %729 = vmatprep.subr.mxu0 0.0
        %730 = vmatpush1.xpose.msra.mxu0 0.0
        %731 = vmatprep.subr.mxu0 0.0
        %732 = vmatpush1.xpose.msra.mxu0 0.0
        %733 = vmatprep.mubr.f32.mxu0 0.0
        %734 = vmatmul.mubr.f32.gmra.mrb[0].mxu0 %v665
        %v735 = vpop.f32.mrb[0].mxu0
        %v736 = vadd.f32 0.0, %v735
        %v737 = vpop.f32.mrb[0].mxu0
        %738 = vdwg.mxu0
        %v739 = vmul.f32 %v736, 0.17677669
        %v740 = vsel %vm409, %v739, -inf
        %741 = vmax.xlane.f32.xlu0 %v740
        %v742 = vpop.xlane.xlu0 %741
        %v743 = vsub.f32 %v739, %v742
        %v744 = vmul.f32 %v743, 1.442695
        %v745 = vpow.pop %v744
        %v746 = vsel %vm409, %v745, 0.0
        %747 = vadd.xlane.f32.xlu0 %v746
        %v748 = vpop.xlane.xlu0 %747
        %v749 = vrcp.pop %v748
        %v750 = vmul.f32 %v745, %v749
        %751 = vrot.lane.b32.xlu0 %v329, 64
        %v752 = vpop.permute.xlu0 %751
        %v755 = vsel %vm409, %v750, 0
        %757 = vmatprep.subr.mxu0 0.0
        %758 = vmatpush1.msra.mxu0 %v752
        %759 = vmatprep.subr.mxu0 0.0
        %760 = vmatpush1.msra.mxu0 0.0
        %761 = vmatprep.subr.mxu0 0.0
        %762 = vmatpush1.msra.mxu0 0.0
        %763 = vmatprep.subr.mxu0 0.0
        %764 = vmatpush1.msra.mxu0 0.0
        %765 = vmatprep.subr.mxu0 0.0
        %766 = vmatpush1.msra.mxu0 0.0
        %767 = vmatprep.subr.mxu0 0.0
        %768 = vmatpush1.msra.mxu0 0.0
        %769 = vmatprep.subr.mxu0 0.0
        %770 = vmatpush1.msra.mxu0 0.0
        %771 = vmatprep.subr.mxu0 0.0
        %772 = vmatpush1.msra.mxu0 0.0
        %773 = vmatprep.subr.mxu0 0.0
        %774 = vmatpush1.msra.mxu0 0.0
        %775 = vmatprep.subr.mxu0 0.0
        %776 = vmatpush1.msra.mxu0 0.0
        %777 = vmatprep.subr.mxu0 0.0
        %778 = vmatpush1.msra.mxu0 0.0
        %779 = vmatprep.subr.mxu0 0.0
        %780 = vmatpush1.msra.mxu0 0.0
        %781 = vmatprep.subr.mxu0 0.0
        %782 = vmatpush1.msra.mxu0 0.0
        %783 = vmatprep.subr.mxu0 0.0
        %784 = vmatpush1.msra.mxu0 0.0
        %785 = vmatprep.subr.mxu0 0.0
        %786 = vmatpush1.msra.mxu0 0.0
        %787 = vmatprep.subr.mxu0 0.0
        %788 = vmatpush1.msra.mxu0 0.0
        %789 = vmatprep.subr.mxu0 0.0
        %790 = vmatpush1.msra.mxu0 0.0
        %791 = vmatprep.subr.mxu0 0.0
        %792 = vmatpush1.msra.mxu0 0.0
        %793 = vmatprep.subr.mxu0 0.0
        %794 = vmatpush1.msra.mxu0 0.0
        %795 = vmatprep.subr.mxu0 0.0
        %796 = vmatpush1.msra.mxu0 0.0
        %797 = vmatprep.subr.mxu0 0.0
        %798 = vmatpush1.msra.mxu0 0.0
        %799 = vmatprep.subr.mxu0 0.0
        %800 = vmatpush1.msra.mxu0 0.0
        %801 = vmatprep.subr.mxu0 0.0
        %802 = vmatpush1.msra.mxu0 0.0
        %803 = vmatprep.subr.mxu0 0.0
        %804 = vmatpush1.msra.mxu0 0.0
        %805 = vmatprep.subr.mxu0 0.0
        %806 = vmatpush1.msra.mxu0 0.0
        %807 = vmatprep.subr.mxu0 0.0
        %808 = vmatpush1.msra.mxu0 0.0
        %809 = vmatprep.subr.mxu0 0.0
        %810 = vmatpush1.msra.mxu0 0.0
        %811 = vmatprep.subr.mxu0 0.0
        %812 = vmatpush1.msra.mxu0 0.0
        %813 = vmatprep.subr.mxu0 0.0
        %814 = vmatpush1.msra.mxu0 0.0
        %815 = vmatprep.subr.mxu0 0.0
        %816 = vmatpush1.msra.mxu0 0.0
        %817 = vmatprep.subr.mxu0 0.0
        %818 = vmatpush1.msra.mxu0 0.0
        %819 = vmatprep.subr.mxu0 0.0
        %820 = vmatpush1.msra.mxu0 0.0
        %821 = vmatprep.mubr.f32.mxu0 0.0
        %822 = vmatmul.mubr.f32.gmra.mrb[0].mxu0 %v755
        %v823 = vpop.f32.mrb[0].mxu0
        %v824 = vadd.f32 0.0, %v823
        %v825 = vpop.f32.mrb[0].mxu0
        %826 = vdwg.mxu0
        %827 = vrot.lane.b32.xlu0 %v258, 32
        %v828 = vpop.permute.xlu0 %827
        %829 = vrot.lane.b32.xlu0 %v260, 32
        %v830 = vpop.permute.xlu0 %829
        %v831 = vsel %vm187, %v828, 0
        %v833 = vsel %vm187, %v830, 0
        %835 = vmatprep.subr.mxu0 0.0
        %836 = vmatpush1.xpose.msra.mxu0 %v833
        %837 = vmatprep.subr.mxu0 0.0
        %838 = vmatpush1.xpose.msra.mxu0 0.0
        %839 = vmatprep.subr.mxu0 0.0
        %840 = vmatpush1.xpose.msra.mxu0 0.0
        %841 = vmatprep.subr.mxu0 0.0
        %842 = vmatpush1.xpose.msra.mxu0 0.0
        %843 = vmatprep.subr.mxu0 0.0
        %844 = vmatpush1.xpose.msra.mxu0 0.0
        %845 = vmatprep.subr.mxu0 0.0
        %846 = vmatpush1.xpose.msra.mxu0 0.0
        %847 = vmatprep.subr.mxu0 0.0
        %848 = vmatpush1.xpose.msra.mxu0 0.0
        %849 = vmatprep.subr.mxu0 0.0
        %850 = vmatpush1.xpose.msra.mxu0 0.0
        %851 = vmatprep.subr.mxu0 0.0
        %852 = vmatpush1.xpose.msra.mxu0 0.0
        %853 = vmatprep.subr.mxu0 0.0
        %854 = vmatpush1.xpose.msra.mxu0 0.0
        %855 = vmatprep.subr.mxu0 0.0
        %856 = vmatpush1.xpose.msra.mxu0 0.0
        %857 = vmatprep.subr.mxu0 0.0
        %858 = vmatpush1.xpose.msra.mxu0 0.0
        %859 = vmatprep.subr.mxu0 0.0
        %860 = vmatpush1.xpose.msra.mxu0 0.0
        %861 = vmatprep.subr.mxu0 0.0
        %862 = vmatpush1.xpose.msra.mxu0 0.0
        %863 = vmatprep.subr.mxu0 0.0
        %864 = vmatpush1.xpose.msra.mxu0 0.0
        %865 = vmatprep.subr.mxu0 0.0
        %866 = vmatpush1.xpose.msra.mxu0 0.0
        %867 = vmatprep.subr.mxu0 0.0
        %868 = vmatpush1.xpose.msra.mxu0 0.0
        %869 = vmatprep.subr.mxu0 0.0
        %870 = vmatpush1.xpose.msra.mxu0 0.0
        %871 = vmatprep.subr.mxu0 0.0
        %872 = vmatpush1.xpose.msra.mxu0 0.0
        %873 = vmatprep.subr.mxu0 0.0
        %874 = vmatpush1.xpose.msra.mxu0 0.0
        %875 = vmatprep.subr.mxu0 0.0
        %876 = vmatpush1.xpose.msra.mxu0 0.0
        %877 = vmatprep.subr.mxu0 0.0
        %878 = vmatpush1.xpose.msra.mxu0 0.0
        %879 = vmatprep.subr.mxu0 0.0
        %880 = vmatpush1.xpose.msra.mxu0 0.0
        %881 = vmatprep.subr.mxu0 0.0
        %882 = vmatpush1.xpose.msra.mxu0 0.0
        %883 = vmatprep.subr.mxu0 0.0
        %884 = vmatpush1.xpose.msra.mxu0 0.0
        %885 = vmatprep.subr.mxu0 0.0
        %886 = vmatpush1.xpose.msra.mxu0 0.0
        %887 = vmatprep.subr.mxu0 0.0
        %888 = vmatpush1.xpose.msra.mxu0 0.0
        %889 = vmatprep.subr.mxu0 0.0
        %890 = vmatpush1.xpose.msra.mxu0 0.0
        %891 = vmatprep.subr.mxu0 0.0
        %892 = vmatpush1.xpose.msra.mxu0 0.0
        %893 = vmatprep.subr.mxu0 0.0
        %894 = vmatpush1.xpose.msra.mxu0 0.0
        %895 = vmatprep.subr.mxu0 0.0
        %896 = vmatpush1.xpose.msra.mxu0 0.0
        %897 = vmatprep.subr.mxu0 0.0
        %898 = vmatpush1.xpose.msra.mxu0 0.0
        %899 = vmatprep.mubr.f32.mxu0 0.0
        %900 = vmatmul.mubr.f32.gmra.mrb[0].mxu0 %v831
        %v901 = vpop.f32.mrb[0].mxu0
        %v902 = vadd.f32 0.0, %v901
        %v903 = vpop.f32.mrb[0].mxu0
        %904 = vdwg.mxu0
        %v905 = vmul.f32 %v902, 0.17677669
        %v906 = vsel %vm409, %v905, -inf
        %907 = vmax.xlane.f32.xlu0 %v906
        %v908 = vpop.xlane.xlu0 %907
        %v909 = vsub.f32 %v905, %v908
        %v910 = vmul.f32 %v909, 1.442695
        %v911 = vpow.pop %v910
        %v912 = vsel %vm409, %v911, 0.0
        %913 = vadd.xlane.f32.xlu0 %v912
        %v914 = vpop.xlane.xlu0 %913
        %v915 = vrcp.pop %v914
        %v916 = vmul.f32 %v911, %v915
        %917 = vrot.lane.b32.xlu0 %v329, 32
        %v918 = vpop.permute.xlu0 %917
        %v921 = vsel %vm409, %v916, 0
        %923 = vmatprep.subr.mxu0 0.0
        %924 = vmatpush1.msra.mxu0 %v918
        %925 = vmatprep.subr.mxu0 0.0
        %926 = vmatpush1.msra.mxu0 0.0
        %927 = vmatprep.subr.mxu0 0.0
        %928 = vmatpush1.msra.mxu0 0.0
        %929 = vmatprep.subr.mxu0 0.0
        %930 = vmatpush1.msra.mxu0 0.0
        %931 = vmatprep.subr.mxu0 0.0
        %932 = vmatpush1.msra.mxu0 0.0
        %933 = vmatprep.subr.mxu0 0.0
        %934 = vmatpush1.msra.mxu0 0.0
        %935 = vmatprep.subr.mxu0 0.0
        %936 = vmatpush1.msra.mxu0 0.0
        %937 = vmatprep.subr.mxu0 0.0
        %938 = vmatpush1.msra.mxu0 0.0
        %939 = vmatprep.subr.mxu0 0.0
        %940 = vmatpush1.msra.mxu0 0.0
        %941 = vmatprep.subr.mxu0 0.0
        %942 = vmatpush1.msra.mxu0 0.0
        %943 = vmatprep.subr.mxu0 0.0
        %944 = vmatpush1.msra.mxu0 0.0
        %945 = vmatprep.subr.mxu0 0.0
        %946 = vmatpush1.msra.mxu0 0.0
        %947 = vmatprep.subr.mxu0 0.0
        %948 = vmatpush1.msra.mxu0 0.0
        %949 = vmatprep.subr.mxu0 0.0
        %950 = vmatpush1.msra.mxu0 0.0
        %951 = vmatprep.subr.mxu0 0.0
        %952 = vmatpush1.msra.mxu0 0.0
        %953 = vmatprep.subr.mxu0 0.0
        %954 = vmatpush1.msra.mxu0 0.0
        %955 = vmatprep.subr.mxu0 0.0
        %956 = vmatpush1.msra.mxu0 0.0
        %957 = vmatprep.subr.mxu0 0.0
        %958 = vmatpush1.msra.mxu0 0.0
        %959 = vmatprep.subr.mxu0 0.0
        %960 = vmatpush1.msra.mxu0 0.0
        %961 = vmatprep.subr.mxu0 0.0
        %962 = vmatpush1.msra.mxu0 0.0
        %963 = vmatprep.subr.mxu0 0.0
        %964 = vmatpush1.msra.mxu0 0.0
        %965 = vmatprep.subr.mxu0 0.0
        %966 = vmatpush1.msra.mxu0 0.0
        %967 = vmatprep.subr.mxu0 0.0
        %968 = vmatpush1.msra.mxu0 0.0
        %969 = vmatprep.subr.mxu0 0.0
        %970 = vmatpush1.msra.mxu0 0.0
        %971 = vmatprep.subr.mxu0 0.0
        %972 = vmatpush1.msra.mxu0 0.0
        %973 = vmatprep.subr.mxu0 0.0
        %974 = vmatpush1.msra.mxu0 0.0
        %975 = vmatprep.subr.mxu0 0.0
        %976 = vmatpush1.msra.mxu0 0.0
        %977 = vmatprep.subr.mxu0 0.0
        %978 = vmatpush1.msra.mxu0 0.0
        %979 = vmatprep.subr.mxu0 0.0
        %980 = vmatpush1.msra.mxu0 0.0
        %981 = vmatprep.subr.mxu0 0.0
        %982 = vmatpush1.msra.mxu0 0.0
        %983 = vmatprep.subr.mxu0 0.0
        %984 = vmatpush1.msra.mxu0 0.0
        %985 = vmatprep.subr.mxu0 0.0
        %986 = vmatpush1.msra.mxu0 0.0
        %987 = vmatprep.mubr.f32.mxu0 0.0
        %988 = vmatmul.mubr.f32.gmra.mrb[0].mxu0 %v921
        %v989 = vpop.f32.mrb[0].mxu0
        %v990 = vadd.f32 0.0, %v989
        %v991 = vpop.f32.mrb[0].mxu0
        %992 = vdwg.mxu0
        %994 = vrot.lane.b32.xlu0 %v658, 32
        %v995 = vpop.permute.xlu0 %994
        %998 = vrot.lane.b32.xlu0 %v824, 64
        %v999 = vpop.permute.xlu0 %998
        %1002 = vrot.lane.b32.xlu0 %v990, 96
        %v1003 = vpop.permute.xlu0 %1002
        %v1005 = vsel %vm187, %v491, %v995
        %vm1006 = vcmask 523264
        %v1007 = vsel %vm1006, %v1005, %v999
        %vm1008 = vcmask 785408
        %v1009 = vsel %vm1008, %v1007, %v1003
        %1010 = vst [vmem:[%s173] sm:$0xff] %v1009
        %s1011 = sand.u32 %s75, 1
        %s1012 = scalar_lea.sflag [#allocation4], %s1011
        %s1013 = sand.u32 %s75, 1
        %s1014 = smul.addr %s1013, 8
        %s1015 = scalar_lea.vmem [#allocation7], %s1014
        // Predicated region
        $region37: #{tpu_custom_call.1} parent=27 // pred_check
          %p1016 = pneg %p85
        $region38: #{tpu_custom_call.1} parent=27 // pred_check_branch
          %1018 = sbr.rel (%p1016) target = $region40
        $region39: #{tpu_custom_call.1} parent=27 // pred_region
          %s1020 = ssub.s32 128, 128
          %1021 = vsyncadd %s1012, %s1020
          %s1022 = smul.addr %s20, 128
          %s1023 = scalar_lea.hbm %s2, %s1022
          %s1025 = sshll.u32 %s1015, 4
          %s1026 = int_to_ptr.vmem [resolvable:$true] %s1025
          %1028 = dma.vmem_to_hbm [thread:$0]  %s1026, 128, %s1023, %s1012
        $region40: #{tpu_custom_call.1} parent=27 // pred_fallthru
          _
      $region28: #{tpu_custom_call.1} parent=5 // pred_fallthru
        _
      %p1029 = scmp.le.s32.totalorder 2, %s15
      // Predicated region
      $region41: #{tpu_custom_call.1} parent=5 // pred_check
        %p1030 = pneg %p1029
      $region42: #{tpu_custom_call.1} parent=5 // pred_check_branch
        %1032 = sbr.rel (%p1030) target = $region44
      $region43: #{tpu_custom_call.1} parent=5 // pred_region
        %s1033 = ssub.s32 %s15, 2
        // Predicated region
        $region45: #{tpu_custom_call.1} parent=43 // pred_check
          %p1034 = pneg %p91
        $region46: #{tpu_custom_call.1} parent=43 // pred_check_branch
          %1036 = sbr.rel (%p1034) target = $region48
        $region47: #{tpu_custom_call.1} parent=43 // pred_region
          %s1037 = sand.u32 %s76, 1
          %s1038 = scalar_lea.sflag [#allocation4], %s1037
          %s1039 = sand.u32 %s76, 1
          %s1040 = smul.addr %s1039, 8
          %s1041 = scalar_lea.vmem [#allocation7], %s1040
          %1042 = dma.done %s1038, 128
        $region48: #{tpu_custom_call.1} parent=43 // pred_fallthru
          _
      $region44: #{tpu_custom_call.1} parent=5 // pred_fallthru
        _
    $region6: #{tpu_custom_call.1} parent=1 // loop_footer
      %s19 = sadd.s32 1, %s15
    $region7: #{tpu_custom_call.1} parent=1 // loop_footer_branch
      %14 = sbr.rel target = $region3
    $region8: #{tpu_custom_call.1} parent=1 // loop_exit
      _
    %1043 = vsyncpa [#allocation3], 1
    %s1044 = scalar_lea.sflag [#allocation3], 1
    %1045 = vsyncpa %s1044, 1
    %1046 = vsyncpa [#allocation6], 1
    %1047 = vsyncpa [#allocation4], 1
    %s1048 = scalar_lea.sflag [#allocation4], 1
    %1049 = vsyncpa %s1048, 1

</llo_original>
